<compile_context>
chip_gen: v7x
topology: tpu7x:2x2x1
jax: 0.10.0
libtpu: 0.0.40
codegen_flags: <defaults>
</compile_context>

<pallas_src>
import functools
import math

import jax
import jax.numpy as jnp
import numpy as np
from jax.experimental import pallas as pl
from jax.experimental.pallas import tpu as pltpu

# ---- ArcMarginLoss hyper-parameters (from __init__, easy_margin=False) ----
S = 32.0
M = 0.4
WAYS = 10
GAMMA = 2.0          # FocalLoss gamma
EPS_ARC = 1e-6       # ArcMarginLoss.eps
EPS_CE = 1e-10       # FocalLoss eps added to logits
COS_M = math.cos(M)
SIN_M = math.sin(M)
TH = math.cos(math.pi - M)
MM = math.sin(math.pi - M) * M


def _round_up(v, m):
    return ((v + m - 1) // m) * m


def _vmem_limit_bytes(tile_b, d, w, mm_dtype):
    """Scoped-VMEM request sized from the tiles, with headroom, capped for v7x safety."""
    f32 = 4
    mm = jnp.dtype(mm_dtype).itemsize
    need = (2 * tile_b * d * f32            # double-buffered x tile
            + 2 * tile_b * 1 * 4            # double-buffered label tile
            + w * d * f32                   # resident class-weight tile
            + w * d * mm                    # normalized-weight scratch
            + 2 * 1 * 1 * f32               # resident (1,1) output/accumulator
            + 8 * tile_b * max(w, 128) * f32)  # elementwise intermediates headroom
    return int(min(max(4 * need, 8 << 20), 32 << 20))


# -------------------------------------------------------------------------
# Fused kernel: normalize -> cosine matmul -> arc margin -> CE sum accumulate
# -> (last tile) batch mean + focal transform.
# -------------------------------------------------------------------------
def _arc_margin_focal_kernel(x_ref, w_ref, lbl_ref, out_ref, wn_ref, *,
                             n_valid, tile_b, n_ways, mm_dtype):
    i = pl.program_id(0)

    @pl.when(i == 0)
    def _init():
        # zero the on-chip CE-sum accumulator (the resident (1,1) output block)
        out_ref[...] = jnp.zeros_like(out_ref)
        # normalize class weights once; keep them resident in matmul dtype
        w = w_ref[...]                                           # (W, D) f32
        w_inv = jax.lax.rsqrt(jnp.maximum(jnp.sum(w * w, axis=-1, keepdims=True), 1e-24))
        wn_ref[...] = (w * w_inv).astype(mm_dtype)

    # --- normalize the current batch tile (rsqrt + mul; clamp == max(||v||,1e-12)) ---
    x = x_ref[...]                                               # (TB, D) f32
    x_inv = jax.lax.rsqrt(jnp.maximum(jnp.sum(x * x, axis=-1, keepdims=True), 1e-24))
    xn = (x * x_inv).astype(mm_dtype)

    # --- cosine similarity: contract over hidden dim directly (no transpose) ---
    cos = jax.lax.dot_general(
        xn, wn_ref[...],
        dimension_numbers=(((1,), (1,)), ((), ())),
        preferred_element_type=jnp.float32,
    )                                                            # (TB, W) f32

    # --- arc margin (easy_margin=False) ---
    sine = jnp.sqrt(jnp.maximum(1.0 - cos * cos + EPS_ARC, 0.0))  # clamp keeps bf16 path NaN-safe
    cos_phi = cos * COS_M - sine * SIN_M
    cos_phi = jnp.where(cos > TH, cos_phi, cos - MM)

    lbl = lbl_ref[...]                                           # (TB, 1) i32
    col = jax.lax.broadcasted_iota(jnp.int32, (tile_b, n_ways), 1)
    one_hot = (col == lbl).astype(jnp.float32)

    # metric = (one_hot*cos_phi + (1-one_hot)*cos) * S, rewritten to save VALU ops
    logits = (cos + one_hot * (cos_phi - cos)) * S + EPS_CE

    # --- cross entropy per row (log-sum-exp) ---
    row_max = jnp.max(logits, axis=-1, keepdims=True)
    lse = jnp.log(jnp.sum(jnp.exp(logits - row_max), axis=-1, keepdims=True)) + row_max
    tgt = jnp.sum(one_hot * logits, axis=-1, keepdims=True)

    # mask rows that are batch padding (global row index >= true batch size)
    row = i * tile_b + jax.lax.broadcasted_iota(jnp.int32, (tile_b, 1), 0)
    valid = (row < n_valid).astype(jnp.float32)
    ce = (lse - tgt) * valid                                     # (TB, 1)

    out_ref[...] += jnp.sum(ce, axis=0, keepdims=True)           # accumulate on-chip

    @pl.when(i == pl.num_programs(0) - 1)
    def _finalize():
        L = out_ref[...] * (1.0 / n_valid)                       # batch-mean CE, (1,1)
        p = jnp.exp(-L)
        out_ref[...] = (1.0 - p) ** GAMMA * L                    # focal transform


def arc_margin_focal_loss(x, w, label, *, block_b=128, matmul_dtype=jnp.float32):
    """Fused cosine(x, w) + ArcMarginLoss + FocalLoss forward. Returns a scalar f32 loss."""
    B, D = x.shape
    W, D2 = w.shape
    assert D == D2

    x = x.astype(jnp.float32)
    w = w.astype(jnp.float32)
    lbl = label.reshape(B, 1).astype(jnp.int32)

    # batch tile: multiple of 8 sublanes, capped by block_b
    TB = max(8, min(_round_up(block_b, 8), _round_up(B, 8)))
    B_pad = _round_up(B, TB)
    if B_pad != B:
        x = jnp.pad(x, ((0, B_pad - B), (0, 0)))
        lbl = jnp.pad(lbl, ((0, B_pad - B), (0, 0)))
    grid = (B_pad // TB,)

    kernel = functools.partial(
        _arc_margin_focal_kernel,
        n_valid=B, tile_b=TB, n_ways=W, mm_dtype=matmul_dtype,
    )

    out = pl.pallas_call(
        kernel,
        out_shape=jax.ShapeDtypeStruct((1, 1), jnp.float32),
        grid_spec=pltpu.PrefetchScalarGridSpec(
            num_scalar_prefetch=0,
            grid=grid,
            in_specs=[
                pl.BlockSpec((TB, D), lambda i: (i, 0)),   # x tile, pipelined over batch
                pl.BlockSpec((W, D), lambda i: (0, 0)),    # class weights, resident
                pl.BlockSpec((TB, 1), lambda i: (i, 0)),   # labels tile
            ],
            out_specs=pl.BlockSpec((1, 1), lambda i: (0, 0)),  # resident accumulator output
            scratch_shapes=[pltpu.VMEM((W, D), matmul_dtype)],  # normalized weights
        ),
        compiler_params=pltpu.CompilerParams(
            # the batch axis carries the on-chip loss accumulator -> must be serial.
            # (On v7x one could instead emit per-core partial CE sums + a tiny combine pass
            #  to use both TensorCores; not needed at these sizes.)
            dimension_semantics=("arbitrary",),
            vmem_limit_bytes=_vmem_limit_bytes(TB, D, W, matmul_dtype),
        ),
    )(x, w, lbl)
    return out[0, 0]


# -------------------------------------------------------------------------
# Pure-JAX reference (mirrors the PyTorch forward) for correctness checking.
# -------------------------------------------------------------------------
def reference(x, w, label):
    xn = x / jnp.maximum(jnp.linalg.norm(x, axis=-1, keepdims=True), 1e-12)
    wn = w / jnp.maximum(jnp.linalg.norm(w, axis=-1, keepdims=True), 1e-12)
    cos = xn @ wn.T
    sine = jnp.sqrt(1.0 - cos ** 2 + EPS_ARC)
    cos_phi = cos * COS_M - sine * SIN_M
    cos_phi = jnp.where(cos > TH, cos_phi, cos - MM)
    one_hot = jax.nn.one_hot(label, WAYS, dtype=jnp.float32)
    metric = (one_hot * cos_phi + (1.0 - one_hot) * cos) * S
    logits = metric + EPS_CE
    log_probs = jax.nn.log_softmax(logits, axis=-1)
    L = -jnp.mean(jnp.sum(one_hot * log_probs, axis=-1))
    p = jnp.exp(-L)
    return (1.0 - p) ** GAMMA * L


if __name__ == "__main__":
    key = jax.random.PRNGKey(0)
    kx, kw, kl, kx2, kl2 = jax.random.split(key, 5)

    # --- case 1: batch=8, hidden=32, ways=10 (single tile) ---
    B, D = 8, 32
    x = jax.random.normal(kx, (B, D), dtype=jnp.float32)
    w = jax.random.normal(kw, (WAYS, D), dtype=jnp.float32)   # deterministic "class weight" init
    label = jax.random.randint(kl, (B,), 0, WAYS, dtype=jnp.int32)

    loss = jax.block_until_ready(arc_margin_focal_loss(x, w, label))
    ref = reference(x, w, label)
    np.testing.assert_allclose(np.asarray(loss), np.asarray(ref), rtol=1e-5, atol=1e-5)

    # --- case 2: batch=20 with an 8-row tile -> exercises the gridded accumulator + row masking ---
    B2 = 20
    x2 = jax.random.normal(kx2, (B2, D), dtype=jnp.float32)
    label2 = jax.random.randint(kl2, (B2,), 0, WAYS, dtype=jnp.int32)
    loss2 = jax.block_until_ready(arc_margin_focal_loss(x2, w, label2, block_b=8))
    ref2 = reference(x2, w, label2)
    np.testing.assert_allclose(np.asarray(loss2), np.asarray(ref2), rtol=2e-5, atol=2e-5)

    # --- bf16 MXU inputs with f32 accumulation (loose check vs. the f32 reference) ---
    loss_bf16 = jax.block_until_ready(
        arc_margin_focal_loss(x, w, label, matmul_dtype=jnp.bfloat16))
    np.testing.assert_allclose(np.asarray(loss_bf16), np.asarray(ref), rtol=1e-1, atol=1e-1)

    print("KERNEL_OK")
</pallas_src>

<mosaic_0001>
module attributes {stable_mosaic.version = 11 : i64} {
  func.func @_arc_margin_focal_kernel(%arg0: i32, %arg1: memref<8x32xf32, #tpu.memory_space<vmem>>, %arg2: memref<10x32xf32, #tpu.memory_space<vmem>>, %arg3: memref<8x1xi32, #tpu.memory_space<vmem>>, %arg4: memref<1x1xf32, #tpu.memory_space<vmem>>, %arg5: memref<10x32xf32, #tpu.memory_space<vmem>>) attributes {dimension_semantics = [#tpu.dimension_semantics<arbitrary>], iteration_bounds = array<i64: 1>, scalar_prefetch = 0 : i64, scratch_operands = 1 : i64, tpu.core_type = #tpu.core_type<tc>, window_params = [{transform_indices = @transform_0, window_bounds = array<i64: 8, 32>}, {pipeline_mode = #tpu.pipeline_mode<synchronous>, transform_indices = @transform_1, window_bounds = array<i64: 10, 32>}, {transform_indices = @transform_2, window_bounds = array<i64: 8, 1>}, {pipeline_mode = #tpu.pipeline_mode<synchronous>, transform_indices = @transform_3, window_bounds = array<i64: 1, 1>}]} {
    %c0_i32 = arith.constant 0 : i32
    %0 = arith.cmpi eq, %arg0, %c0_i32 : i32
    %1 = arith.extui %0 : i1 to i32
    %c0_i32_0 = arith.constant 0 : i32
    %2 = arith.cmpi ne, %1, %c0_i32_0 : i32
    scf.if %2 {
      %cst_28 = arith.constant 0.000000e+00 : f32
      %75 = vector.broadcast %cst_28 : f32 to vector<1x1xf32>
      %c0_29 = arith.constant 0 : index
      %c0_30 = arith.constant 0 : index
      %76 = vector.load %arg4[%c0_29, %c0_30] : memref<1x1xf32, #tpu.memory_space<vmem>>, vector<1x1xf32>
      tpu.vector_store %arg4[%c0_29, %c0_30], %75 {strides = array<i32>} : memref<1x1xf32, #tpu.memory_space<vmem>>, vector<1x1xf32>,
      %c0_31 = arith.constant 0 : index
      %c0_32 = arith.constant 0 : index
      %77 = vector.load %arg2[%c0_31, %c0_32] : memref<10x32xf32, #tpu.memory_space<vmem>>, vector<10x32xf32>
      %78 = arith.mulf %77, %77 : vector<10x32xf32>
      %cst_33 = arith.constant dense<0.000000e+00> : vector<10xf32>
      %79 = vector.multi_reduction <add>, %78, %cst_33 [1] : vector<10x32xf32> to vector<10xf32>
      %80 = vector.shape_cast %79 : vector<10xf32> to vector<10x1xf32>
      %cst_34 = arith.constant 1.000000e-24 : f32
      %81 = vector.broadcast %cst_34 : f32 to vector<10x1xf32>
      %82 = arith.maximumf %80, %81 : vector<10x1xf32>
      %83 = math.rsqrt %82 : vector<10x1xf32>
      %84 = vector.broadcast %83 : vector<10x1xf32> to vector<10x32xf32>
      %85 = arith.mulf %77, %84 : vector<10x32xf32>
      %c0_35 = arith.constant 0 : index
      %c0_36 = arith.constant 0 : index
      %86 = vector.load %arg5[%c0_35, %c0_36] : memref<10x32xf32, #tpu.memory_space<vmem>>, vector<10x32xf32>
      tpu.vector_store %arg5[%c0_35, %c0_36], %85 {strides = array<i32>} : memref<10x32xf32, #tpu.memory_space<vmem>>, vector<10x32xf32>,
    } else {
    }
    %c0 = arith.constant 0 : index
    %c0_1 = arith.constant 0 : index
    %3 = vector.load %arg1[%c0, %c0_1] : memref<8x32xf32, #tpu.memory_space<vmem>>, vector<8x32xf32>
    %4 = arith.mulf %3, %3 : vector<8x32xf32>
    %cst = arith.constant dense<0.000000e+00> : vector<8xf32>
    %5 = vector.multi_reduction <add>, %4, %cst [1] : vector<8x32xf32> to vector<8xf32>
    %6 = vector.shape_cast %5 : vector<8xf32> to vector<8x1xf32>
    %cst_2 = arith.constant 1.000000e-24 : f32
    %7 = vector.broadcast %cst_2 : f32 to vector<8x1xf32>
    %8 = arith.maximumf %6, %7 : vector<8x1xf32>
    %9 = math.rsqrt %8 : vector<8x1xf32>
    %10 = vector.broadcast %9 : vector<8x1xf32> to vector<8x32xf32>
    %11 = arith.mulf %3, %10 : vector<8x32xf32>
    %c0_3 = arith.constant 0 : index
    %c0_4 = arith.constant 0 : index
    %12 = vector.load %arg5[%c0_3, %c0_4] : memref<10x32xf32, #tpu.memory_space<vmem>>, vector<10x32xf32>
    %cst_5 = arith.constant dense<0.000000e+00> : vector<8x10xf32>
    %13 = tpu.matmul %11, %12, %cst_5 {dimension_numbers = #tpu.dot_dimension_numbers<[1], [1], [0], [0], [0, 0, 1, 0], [], []>} : vector<8x32xf32>, vector<10x32xf32>, vector<8x10xf32> -> vector<8x10xf32>
    %14 = arith.mulf %13, %13 : vector<8x10xf32>
    %cst_6 = arith.constant 1.000000e+00 : f32
    %15 = vector.broadcast %cst_6 : f32 to vector<8x10xf32>
    %16 = arith.subf %15, %14 : vector<8x10xf32>
    %cst_7 = arith.constant 9.99999997E-7 : f32
    %17 = vector.broadcast %cst_7 : f32 to vector<8x10xf32>
    %18 = arith.addf %16, %17 : vector<8x10xf32>
    %cst_8 = arith.constant 0.000000e+00 : f32
    %19 = vector.broadcast %cst_8 : f32 to vector<8x10xf32>
    %20 = arith.maximumf %18, %19 : vector<8x10xf32>
    %21 = math.sqrt %20 : vector<8x10xf32>
    %cst_9 = arith.constant 0.921060979 : f32
    %22 = vector.broadcast %cst_9 : f32 to vector<8x10xf32>
    %23 = arith.mulf %13, %22 : vector<8x10xf32>
    %cst_10 = arith.constant 0.389418334 : f32
    %24 = vector.broadcast %cst_10 : f32 to vector<8x10xf32>
    %25 = arith.mulf %21, %24 : vector<8x10xf32>
    %26 = arith.subf %23, %25 : vector<8x10xf32>
    %cst_11 = arith.constant -0.921060979 : f32
    %27 = vector.broadcast %cst_11 : f32 to vector<8x10xf32>
    %28 = arith.cmpf ogt, %13, %27 : vector<8x10xf32>
    %cst_12 = arith.constant 0.155767336 : f32
    %29 = vector.broadcast %cst_12 : f32 to vector<8x10xf32>
    %30 = arith.subf %13, %29 : vector<8x10xf32>
    %31 = arith.select %28, %26, %30 : vector<8x10xi1>, vector<8x10xf32>
    %c0_13 = arith.constant 0 : index
    %c0_14 = arith.constant 0 : index
    %32 = vector.load %arg3[%c0_13, %c0_14] : memref<8x1xi32, #tpu.memory_space<vmem>>, vector<8x1xi32>
    %33 = tpu.iota {dimensions = array<i32: 1>} : vector<8x10xi32>
    %34 = vector.broadcast %32 : vector<8x1xi32> to vector<8x10xi32>
    %35 = arith.cmpi eq, %33, %34 : vector<8x10xi32>
    %36 = arith.extui %35 : vector<8x10xi1> to vector<8x10xi32>
    %37 = arith.sitofp %36 : vector<8x10xi32> to vector<8x10xf32>
    %38 = arith.subf %31, %13 : vector<8x10xf32>
    %39 = arith.mulf %37, %38 : vector<8x10xf32>
    %40 = arith.addf %13, %39 : vector<8x10xf32>
    %cst_15 = arith.constant 3.200000e+01 : f32
    %41 = vector.broadcast %cst_15 : f32 to vector<8x10xf32>
    %42 = arith.mulf %40, %41 : vector<8x10xf32>
    %cst_16 = arith.constant 1.000000e-10 : f32
    %43 = vector.broadcast %cst_16 : f32 to vector<8x10xf32>
    %44 = arith.addf %42, %43 : vector<8x10xf32>
    %cst_17 = arith.constant dense<0xFF800000> : vector<8xf32>
    %45 = vector.multi_reduction <maximumf>, %44, %cst_17 [1] : vector<8x10xf32> to vector<8xf32>
    %46 = vector.shape_cast %45 : vector<8xf32> to vector<8x1xf32>
    %47 = vector.broadcast %46 : vector<8x1xf32> to vector<8x10xf32>
    %48 = arith.subf %44, %47 : vector<8x10xf32>
    %49 = math.exp %48 : vector<8x10xf32>
    %cst_18 = arith.constant dense<0.000000e+00> : vector<8xf32>
    %50 = vector.multi_reduction <add>, %49, %cst_18 [1] : vector<8x10xf32> to vector<8xf32>
    %51 = vector.shape_cast %50 : vector<8xf32> to vector<8x1xf32>
    %52 = math.log %51 : vector<8x1xf32>
    %53 = arith.addf %52, %46 : vector<8x1xf32>
    %54 = arith.mulf %37, %44 : vector<8x10xf32>
    %cst_19 = arith.constant dense<0.000000e+00> : vector<8xf32>
    %55 = vector.multi_reduction <add>, %54, %cst_19 [1] : vector<8x10xf32> to vector<8xf32>
    %56 = vector.shape_cast %55 : vector<8xf32> to vector<8x1xf32>
    %c8_i32 = arith.constant 8 : i32
    %57 = arith.muli %arg0, %c8_i32 : i32
    %58 = tpu.iota {dimensions = array<i32: 0>} : vector<8x1xi32>
    %59 = vector.broadcast %57 : i32 to vector<8x1xi32>
    %60 = arith.addi %59, %58 : vector<8x1xi32>
    %c8_i32_20 = arith.constant 8 : i32
    %61 = vector.broadcast %c8_i32_20 : i32 to vector<8x1xi32>
    %62 = arith.cmpi slt, %60, %61 : vector<8x1xi32>
    %63 = arith.extui %62 : vector<8x1xi1> to vector<8x1xi32>
    %64 = arith.sitofp %63 : vector<8x1xi32> to vector<8x1xf32>
    %65 = arith.subf %53, %56 : vector<8x1xf32>
    %66 = arith.mulf %65, %64 : vector<8x1xf32>
    %c0_21 = arith.constant 0 : index
    %c0_22 = arith.constant 0 : index
    %67 = vector.load %arg4[%c0_21, %c0_22] : memref<1x1xf32, #tpu.memory_space<vmem>>, vector<1x1xf32>
    %cst_23 = arith.constant dense<0.000000e+00> : vector<1xf32>
    %68 = vector.multi_reduction <add>, %66, %cst_23 [0] : vector<8x1xf32> to vector<1xf32>
    %69 = vector.shape_cast %68 : vector<1xf32> to vector<1x1xf32>
    %70 = arith.addf %67, %69 : vector<1x1xf32>
    %c0_24 = arith.constant 0 : index
    %c0_25 = arith.constant 0 : index
    %71 = vector.load %arg4[%c0_24, %c0_25] : memref<1x1xf32, #tpu.memory_space<vmem>>, vector<1x1xf32>
    tpu.vector_store %arg4[%c0_24, %c0_25], %70 {strides = array<i32>} : memref<1x1xf32, #tpu.memory_space<vmem>>, vector<1x1xf32>,
    %c0_i32_26 = arith.constant 0 : i32
    %72 = arith.cmpi eq, %arg0, %c0_i32_26 : i32
    %73 = arith.extui %72 : i1 to i32
    %c0_i32_27 = arith.constant 0 : i32
    %74 = arith.cmpi ne, %73, %c0_i32_27 : i32
    scf.if %74 {
      %c0_28 = arith.constant 0 : index
      %c0_29 = arith.constant 0 : index
      %75 = vector.load %arg4[%c0_28, %c0_29] : memref<1x1xf32, #tpu.memory_space<vmem>>, vector<1x1xf32>
      %cst_30 = arith.constant 1.250000e-01 : f32
      %76 = vector.broadcast %cst_30 : f32 to vector<1x1xf32>
      %77 = arith.mulf %75, %76 : vector<1x1xf32>
      %cst_31 = arith.constant 0.000000e+00 : f32
      %78 = vector.broadcast %cst_31 : f32 to vector<1x1xf32>
      %79 = arith.subf %78, %77 : vector<1x1xf32>
      %80 = math.exp %79 : vector<1x1xf32>
      %cst_32 = arith.constant 1.000000e+00 : f32
      %81 = vector.broadcast %cst_32 : f32 to vector<1x1xf32>
      %82 = arith.subf %81, %80 : vector<1x1xf32>
      %cst_33 = arith.constant 2.000000e+00 : f32
      %83 = vector.broadcast %cst_33 : f32 to vector<1x1xf32>
      %84 = math.powf %82, %83 : vector<1x1xf32>
      %85 = arith.mulf %84, %77 : vector<1x1xf32>
      %c0_34 = arith.constant 0 : index
      %c0_35 = arith.constant 0 : index
      %86 = vector.load %arg4[%c0_34, %c0_35] : memref<1x1xf32, #tpu.memory_space<vmem>>, vector<1x1xf32>
      tpu.vector_store %arg4[%c0_34, %c0_35], %85 {strides = array<i32>} : memref<1x1xf32, #tpu.memory_space<vmem>>, vector<1x1xf32>,
    } else {
    }
    return
  }
  func.func @transform_0(%arg0: i32) -> (i32, i32) {
    %c0_i32 = arith.constant 0 : i32
    %c0_i32_0 = arith.constant 0 : i32
    return %arg0, %c0_i32 : i32, i32
  }
  func.func @transform_1(%arg0: i32) -> (i32, i32) {
    %c0_i32 = arith.constant 0 : i32
    %c0_i32_0 = arith.constant 0 : i32
    %c0_i32_1 = arith.constant 0 : i32
    return %c0_i32, %c0_i32_0 : i32, i32
  }
  func.func @transform_2(%arg0: i32) -> (i32, i32) {
    %c0_i32 = arith.constant 0 : i32
    %c0_i32_0 = arith.constant 0 : i32
    return %arg0, %c0_i32 : i32, i32
  }
  func.func @transform_3(%arg0: i32) -> (i32, i32) {
    %c0_i32 = arith.constant 0 : i32
    %c0_i32_0 = arith.constant 0 : i32
    %c0_i32_1 = arith.constant 0 : i32
    return %c0_i32, %c0_i32_0 : i32, i32
  }
}

</mosaic_0001>

<llo_original>
// kernel: tpu_custom_call.1
$region0: #{tpu_custom_call.1}
  #allocation0 [shape = 'u32[]', space=smem, size = 0x4, offset = 0x4, fixed_abs, tag = 'smem constant byte address 0x4 - core index']
  #allocation1 [shape = 'u32[144,128]{1,0:T(1,128)}', space=vmem, size = 0x12000, scoped, tag = 'internal scratch']
  #allocation2 [shape = 'f32[10,32]{1,0:T(8,128)}', space=vmem, size = 0x2000, scoped, tag = 'scratch operand']
  %s0 = inlined_call_operand.vmem [shape: f32[8,32], index: 0, kind: input, shape index: {}]
  %s1 = inlined_call_operand.hbm [shape: f32[10,32], index: 1, kind: input, shape index: {}]
  %s2 = inlined_call_operand.vmem [shape: s32[8,1], index: 2, kind: input, shape index: {}]
  %s3 = inlined_call_operand.hbm [shape: f32[1,1], index: 3, kind: output, shape index: {}]
  %s4 = sld [smem:[#allocation0]]
  $region34: #{tpu_custom_call.1} parent=0
    _
  %s6 = ssub.s32 1, %s4
  %s7 = scalar_select 0, %s6, %s4
  $region1: #{tpu_custom_call.1} parent=0
    #allocation3 [shape = 'u8[8192]{0}', space=vmem, size = 0x2000, scoped, tag = 'input window, operand 1, single buffered']
    #allocation4 [shape = 's32[1]{0}', space=sflag, size = 0x4, scoped, tag = 'scoped memory for tpu_custom_call.1']
    #allocation5 [shape = 's32[1]{0}', space=sflag, size = 0x4, scoped, tag = 'scoped memory for tpu_custom_call.1']
    #allocation6 [shape = 'u8[512]{0}', space=vmem, size = 0x400, scoped, tag = 'output window, operand 0, single buffered']
    %8 = vsyncpa [#allocation4], 0
    %9 = vsyncpa [#allocation5], 0
    // Predicated region
    $region2: #{tpu_custom_call.1} parent=1 // pred_check
      _
    $region3: #{tpu_custom_call.1} parent=1 // pred_check_branch
      %11 = sbr.rel (0) target = $region5
    $region4: #{tpu_custom_call.1} parent=1 // pred_region
      _
    $region5: #{tpu_custom_call.1} parent=1 // pred_fallthru
      _
    // Predicated region
    $region6: #{tpu_custom_call.1} parent=1 // pred_check
      _
    $region7: #{tpu_custom_call.1} parent=1 // pred_check_branch
      %13 = sbr.rel (0) target = $region9
    $region8: #{tpu_custom_call.1} parent=1 // pred_region
      %s15 = ssub.s32 256, 256
      %16 = vsyncadd [#allocation4], %s15
      %s17 = sshll.u32 [#allocation3], 4
      %s18 = int_to_ptr.vmem [resolvable:$true] %s17
      %23 = dma.hbm_to_vmem [thread:$0]  %s1, 256, %s18, [#allocation4], 128, 128, 8
    $region9: #{tpu_custom_call.1} parent=1 // pred_fallthru
      _
    // Predicated region
    $region10: #{tpu_custom_call.1} parent=1 // pred_check
      _
    $region11: #{tpu_custom_call.1} parent=1 // pred_check_branch
      %25 = sbr.rel (0) target = $region13
    $region12: #{tpu_custom_call.1} parent=1 // pred_region
      _
    $region13: #{tpu_custom_call.1} parent=1 // pred_fallthru
      _
    // Predicated region
    $region14: #{tpu_custom_call.1} parent=1 // pred_check
      _
    $region15: #{tpu_custom_call.1} parent=1 // pred_check_branch
      %27 = sbr.rel (0) target = $region17
    $region16: #{tpu_custom_call.1} parent=1 // pred_region
      %28 = dma.done [#allocation4], 256
    $region17: #{tpu_custom_call.1} parent=1 // pred_fallthru
      _
    %p29 = scmp.eq.s32.totalorder 0, 0
    // Predicated region
    $region18: #{tpu_custom_call.1} parent=1 // pred_check
      %p30 = pneg %p29
    $region19: #{tpu_custom_call.1} parent=1 // pred_check_branch
      %32 = sbr.rel (%p30) target = $region21
    $region20: #{tpu_custom_call.1} parent=1 // pred_region
      %vm33 = vcmask 0
      %34 = vst.msk [vmem:[#allocation6] sm:$0x1] %vm33, 0.0
      %v35 = vld [vmem:[#allocation3] sm:$0xff]
      %v36 = vld [vmem:[#allocation3 + $0x8] sm:$0x3]
      %v37 = vmul.f32 %v35, %v35
      %v38 = vmul.f32 %v36, %v36
      %vm39 = vcmask 261120
      %v40 = vsel %vm39, %v37, 0.0
      %41 = vadd.xlane.f32.xlu0 %v40
      %v42 = vpop.xlane.xlu0 %41
      %vm43 = vcmask 254976
      %v44 = vsel %vm43, %v38, 0.0
      %45 = vadd.xlane.f32.xlu0 %v44
      %v46 = vpop.xlane.xlu0 %45
      %v47 = vmax.f32 %v42, 1e-24
      %v48 = vmax.f32 %v46, 1e-24
      %v49 = vrsqrt.pop %v47
      %v50 = vrsqrt.pop %v48
      %v51 = vmul.f32 %v35, %v49
      %v52 = vmul.f32 %v36, %v50
      %53 = vst.msk [vmem:[#allocation2] sm:$0xff] %vm39, %v51
      %54 = vst.msk [vmem:[#allocation2 + $0x8] sm:$0x3] %vm43, %v52
    $region21: #{tpu_custom_call.1} parent=1 // pred_fallthru
      _
    %v55 = vld [vmem:[%s0] sm:$0xff]
    %v56 = vmul.f32 %v55, %v55
    %vm57 = vcmask 261120
    %v58 = vsel %vm57, %v56, 0.0
    %59 = vadd.xlane.f32.xlu0 %v58
    %v60 = vpop.xlane.xlu0 %59
    %v61 = vmax.f32 %v60, 1e-24
    %v62 = vrsqrt.pop %v61
    %v63 = vmul.f32 %v55, %v62
    %v64 = vld [vmem:[#allocation2] sm:$0xff]
    %v65 = vld [vmem:[#allocation2 + $0x8] sm:$0x3]
    %v67 = vsel %vm57, %v63, 0
    %v70 = vsel %vm57, %v64, 0
    %v73 = vsel %vm57, %v65, 0
    %75 = vmatprep.subr.mxu0 0.0
    %76 = vmatpush1.xpose.msra.mxu0 %v70
    %77 = vmatprep.subr.mxu0 0.0
    %78 = vmatpush1.xpose.msra.mxu0 %v73
    %79 = vmatprep.subr.mxu0 0.0
    %80 = vmatpush1.xpose.msra.mxu0 0.0
    %81 = vmatprep.subr.mxu0 0.0
    %82 = vmatpush1.xpose.msra.mxu0 0.0
    %83 = vmatprep.subr.mxu0 0.0
    %84 = vmatpush1.xpose.msra.mxu0 0.0
    %85 = vmatprep.subr.mxu0 0.0
    %86 = vmatpush1.xpose.msra.mxu0 0.0
    %87 = vmatprep.subr.mxu0 0.0
    %88 = vmatpush1.xpose.msra.mxu0 0.0
    %89 = vmatprep.subr.mxu0 0.0
    %90 = vmatpush1.xpose.msra.mxu0 0.0
    %91 = vmatprep.subr.mxu0 0.0
    %92 = vmatpush1.xpose.msra.mxu0 0.0
    %93 = vmatprep.subr.mxu0 0.0
    %94 = vmatpush1.xpose.msra.mxu0 0.0
    %95 = vmatprep.subr.mxu0 0.0
    %96 = vmatpush1.xpose.msra.mxu0 0.0
    %97 = vmatprep.subr.mxu0 0.0
    %98 = vmatpush1.xpose.msra.mxu0 0.0
    %99 = vmatprep.subr.mxu0 0.0
    %100 = vmatpush1.xpose.msra.mxu0 0.0
    %101 = vmatprep.subr.mxu0 0.0
    %102 = vmatpush1.xpose.msra.mxu0 0.0
    %103 = vmatprep.subr.mxu0 0.0
    %104 = vmatpush1.xpose.msra.mxu0 0.0
    %105 = vmatprep.subr.mxu0 0.0
    %106 = vmatpush1.xpose.msra.mxu0 0.0
    %107 = vmatprep.subr.mxu0 0.0
    %108 = vmatpush1.xpose.msra.mxu0 0.0
    %109 = vmatprep.subr.mxu0 0.0
    %110 = vmatpush1.xpose.msra.mxu0 0.0
    %111 = vmatprep.subr.mxu0 0.0
    %112 = vmatpush1.xpose.msra.mxu0 0.0
    %113 = vmatprep.subr.mxu0 0.0
    %114 = vmatpush1.xpose.msra.mxu0 0.0
    %115 = vmatprep.subr.mxu0 0.0
    %116 = vmatpush1.xpose.msra.mxu0 0.0
    %117 = vmatprep.subr.mxu0 0.0
    %118 = vmatpush1.xpose.msra.mxu0 0.0
    %119 = vmatprep.subr.mxu0 0.0
    %120 = vmatpush1.xpose.msra.mxu0 0.0
    %121 = vmatprep.subr.mxu0 0.0
    %122 = vmatpush1.xpose.msra.mxu0 0.0
    %123 = vmatprep.subr.mxu0 0.0
    %124 = vmatpush1.xpose.msra.mxu0 0.0
    %125 = vmatprep.subr.mxu0 0.0
    %126 = vmatpush1.xpose.msra.mxu0 0.0
    %127 = vmatprep.subr.mxu0 0.0
    %128 = vmatpush1.xpose.msra.mxu0 0.0
    %129 = vmatprep.subr.mxu0 0.0
    %130 = vmatpush1.xpose.msra.mxu0 0.0
    %131 = vmatprep.subr.mxu0 0.0
    %132 = vmatpush1.xpose.msra.mxu0 0.0
    %133 = vmatprep.subr.mxu0 0.0
    %134 = vmatpush1.xpose.msra.mxu0 0.0
    %135 = vmatprep.subr.mxu0 0.0
    %136 = vmatpush1.xpose.msra.mxu0 0.0
    %137 = vmatprep.subr.mxu0 0.0
    %138 = vmatpush1.xpose.msra.mxu0 0.0
    %139 = vmatprep.mubr.f32.mxu0 0.0
    %140 = vmatmul.mubr.f32.gmra.mrb[0].mxu0 %v67
    %v141 = vpop.f32.mrb[0].mxu0
    %v142 = vadd.f32 0.0, %v141
    %v143 = vpop.f32.mrb[0].mxu0
    %144 = vdwg.mxu0
    %v145 = vmul.f32 %v142, %v142
    %v146 = vsub.f32 1.0, %v145
    %v147 = vadd.f32 %v146, 1e-06
    %v148 = vmax.f32 %v147, 0.0
    %v149 = vrsqrt.pop %v148
    %v150 = vmul.f32 %v148, %v149
    %vm151 = vcmp.eq.f32.partialorder %v148, inf
    %v152 = vsel %vm151, %v148, %v150
    %vm153 = vcmp.eq.f32.partialorder %v148, 0.0
    %v154 = vand.u32 %v148, 2147483648
    %v155 = vsel %vm153, %v154, %v152
    %v156 = vmul.f32 %v142, 0.921061
    %v157 = vmul.f32 %v155, 0.38941833
    %v158 = vsub.f32 %v156, %v157
    %vm159 = vcmp.gt.f32.partialorder %v142, -0.921061
    %v160 = vsub.f32 %v142, 0.15576734
    %v161 = vsel %vm159, %v158, %v160
    %v162 = vld [vmem:[%s2] sm:$0xff]
    %v163 = vlaneseq
    %v164 = vand.u32 %v163, 127
    %165 = vset.pattern.permute.xlu0 0
    %166 = vperm.xlu0 %165, %v162
    %v167 = vpop.permute.xlu0 %166
    %vm168 = vcmp.eq.s32.totalorder %v164, %v167
    %v169 = vsel %vm168, 1, 0
    %v170 = vcvt.s32.f32 %v169
    %v171 = vsub.f32 %v161, %v142
    %v172 = vmul.f32 %v170, %v171
    %v173 = vadd.f32 %v142, %v172
    %v174 = vmul.f32 %v173, 32.0
    %v175 = vadd.f32 %v174, 1e-10
    %vm176 = vcmask 80896
    %v177 = vsel %vm176, %v175, -inf
    %178 = vmax.xlane.f32.xlu0 %v177
    %v179 = vpop.xlane.xlu0 %178
    %v180 = vsub.f32 %v175, %v179
    %v181 = vmul.f32 %v180, 1.442695
    %v182 = vpow.pop %v181
    %v183 = vsel %vm176, %v182, 0.0
    %184 = vadd.xlane.f32.xlu0 %v183
    %v185 = vpop.xlane.xlu0 %184
    %v186 = vlog2.pop %v185
    %v187 = vmul.f32 %v186, 0.6931472
    %v188 = vadd.f32 %v187, %v179
    %v189 = vmul.f32 %v170, %v175
    %v190 = vsel %vm176, %v189, 0.0
    %191 = vadd.xlane.f32.xlu0 %v190
    %v192 = vpop.xlane.xlu0 %191
    %s193 = smul.u32 0, 8
    %v194 = vlaneseq
    %v195 = vshrl.u32 %v194, 7
    %v196 = vstv %s193
    %v197 = vadd.s32 %v196, %v195
    %vm198 = vcmp.lt.s32.totalorder %v197, 8
    %v199 = vsel %vm198, 1, 0
    %v200 = vcvt.s32.f32 %v199
    %v201 = vsub.f32 %v188, %v192
    %v202 = vmul.f32 %v201, %v200
    %v203 = vld [vmem:[#allocation6] sm:$0x1]
    %v204 = vrot.slane %v202, 4
    %v205 = vadd.f32 %v202, %v204
    %v206 = vrot.slane %v205, 2
    %v207 = vadd.f32 %v205, %v206
    %v208 = vrot.slane %v207, 1
    %v209 = vadd.f32 %v207, %v208
    %v210 = vadd.f32 %v203, %v209
    %vm211 = vcmask 0
    %212 = vst.msk [vmem:[#allocation6] sm:$0x1] %vm211, %v210
    // Predicated region
    $region22: #{tpu_custom_call.1} parent=1 // pred_check
      %p213 = pneg %p29
    $region23: #{tpu_custom_call.1} parent=1 // pred_check_branch
      %215 = sbr.rel (%p213) target = $region25
    $region24: #{tpu_custom_call.1} parent=1 // pred_region
      %v216 = vld [vmem:[#allocation6] sm:$0x1]
      %v217 = vmul.f32 %v216, 0.125
      %v218 = vsub.f32 0.0, %v217
      %v219 = vmul.f32 %v218, 1.442695
      %v220 = vpow.pop %v219
      %v221 = vsub.f32 1.0, %v220
      %v222 = vpow.f32 %v221, 2.0
      %v223 = vmul.f32 %v222, %v217
      %224 = vst.msk [vmem:[#allocation6] sm:$0x1] %vm211, %v223
    $region25: #{tpu_custom_call.1} parent=1 // pred_fallthru
      _
    // Predicated region
    $region26: #{tpu_custom_call.1} parent=1 // pred_check
      _
    $region27: #{tpu_custom_call.1} parent=1 // pred_check_branch
      %226 = sbr.rel (0) target = $region29
    $region28: #{tpu_custom_call.1} parent=1 // pred_region
      %s228 = ssub.s32 16, 16
      %229 = vsyncadd [#allocation5], %s228
      %s231 = sshll.u32 [#allocation6], 4
      %s232 = int_to_ptr.vmem [resolvable:$true] %s231
      %234 = dma.vmem_to_hbm [thread:$0]  %s232, 16, %s3, [#allocation5]
    $region29: #{tpu_custom_call.1} parent=1 // pred_fallthru
      _
    // Predicated region
    $region30: #{tpu_custom_call.1} parent=1 // pred_check
      _
    $region31: #{tpu_custom_call.1} parent=1 // pred_check_branch
      %236 = sbr.rel (0) target = $region33
    $region32: #{tpu_custom_call.1} parent=1 // pred_region
      %237 = dma.done [#allocation5], 16
    $region33: #{tpu_custom_call.1} parent=1 // pred_fallthru
      _
    %238 = vsyncpa [#allocation4], 1
    %239 = vsyncpa [#allocation5], 1

</llo_original>
